<compile_context>
chip_gen: v7x
topology: tpu7x:2x2x1
jax: 0.10.0
libtpu: 0.0.40
codegen_flags: <defaults>
</compile_context>

<pallas_src>
import jax
import jax.numpy as jnp
from jax.experimental import pallas as pl
from jax.experimental.pallas import tpu as pltpu


def _linear(x, w_ref, b_ref, *, relu):
    w = w_ref[...]
    # Cast the activation to the weight dtype (bf16 path) right before the MXU
    # push; accumulate in f32, keep bias/ReLU/tanh in f32.
    y = jnp.dot(x.astype(w.dtype), w, preferred_element_type=jnp.float32)
    y = y + b_ref[...]
    if relu:
        y = jnp.maximum(y, 0.0)
    return y


def actor_critic_kernel(
    state_ref,
    # feature extraction: Linear(state_dim,256)+ReLU, Linear(256,128)+ReLU
    w1_ref, b1_ref, w2_ref, b2_ref,
    # fused actor/critic first layer: 128 -> (64 actor | 64 critic)
    wh1_ref, bh1_ref,
    # actor tail: 128(zero-padded K)->32, 32->16, 16->1
    aw2_ref, ab2_ref, aw3_ref, ab3_ref, aw4_ref, ab4_ref,
    # critic tail: 128(zero-padded K)->1
    cw2_ref, cb2_ref,
    # outputs
    mean_ref, value_ref,
):
    x = state_ref[...]

    h = _linear(x, w1_ref, b1_ref, relu=True)                # (TB, 256)
    features = _linear(h, w2_ref, b2_ref, relu=True)          # (TB, 128)

    # Fused first head layer: one lane-full 128->128 matmul + ReLU.
    # Lanes 0-63 = actor branch, lanes 64-127 = critic branch.
    h1 = _linear(features, wh1_ref, bh1_ref, relu=True)       # (TB, 128)

    # Actor tail.  aw2 is zero-padded to K=128 (rows 64-127 zero), so the full
    # h1 slab is consumed with no lane slicing.
    a = _linear(h1, aw2_ref, ab2_ref, relu=True)               # (TB, 32)
    a = _linear(a, aw3_ref, ab3_ref, relu=True)                # (TB, 16)
    a = _linear(a, aw4_ref, ab4_ref, relu=False)               # (TB, 1)
    mean_ref[...] = jnp.tanh(a).astype(mean_ref.dtype)

    # Critic tail.  cw2 is zero-padded to K=128 (rows 0-63 zero).
    value = _linear(h1, cw2_ref, cb2_ref, relu=False)          # (TB, 1)
    value_ref[...] = value.astype(value_ref.dtype)


def init_params(key, state_dim):
    """Deterministic parameter init (uniform fan-in, like PyTorch Linear defaults)."""
    dims_feat = [(state_dim, 256), (256, 128)]
    dims_actor = [(128, 64), (64, 32), (32, 16), (16, 1)]
    dims_critic = [(128, 64), (64, 1)]

    def make_linear(k, fan_in, fan_out):
        k1, k2 = jax.random.split(k)
        bound = 1.0 / (fan_in ** 0.5)
        w = jax.random.uniform(k1, (fan_in, fan_out), jnp.float32, -bound, bound)
        b = jax.random.uniform(k2, (1, fan_out), jnp.float32, -bound, bound)
        return w, b

    keys = jax.random.split(key, len(dims_feat) + len(dims_actor) + len(dims_critic))
    ki = 0
    feat, actor, critic = [], [], []
    for din, dout in dims_feat:
        feat.append(make_linear(keys[ki], din, dout)); ki += 1
    for din, dout in dims_actor:
        actor.append(make_linear(keys[ki], din, dout)); ki += 1
    for din, dout in dims_critic:
        critic.append(make_linear(keys[ki], din, dout)); ki += 1

    return {
        "feat": feat,
        "actor": actor,
        "critic": critic,
        "log_std": jnp.zeros((1, 1), jnp.float32),  # nn.Parameter(torch.zeros(1))
    }


def _round_up(x, m):
    return ((x + m - 1) // m) * m


def _default_batch_tile():
    # v5e: smaller tile keeps live intermediates under the spill knee
    # (1 vst slot, no bf16 VPU).  v6e/v7x: 512.
    try:
        kind = jax.devices()[0].device_kind.lower()
    except Exception:
        return 512
    if "v5 lite" in kind or "v5e" in kind or "v5litepod" in kind:
        return 256
    return 512


def _pick_batch_tile(batch, batch_tile):
    b8 = _round_up(max(batch, 1), 8)
    if b8 >= 16:
        # Cap at ~half the batch so the grid has >= 2 steps and
        # dimension_semantics=("parallel",) can shard across v7x's two
        # TensorCores; no effect on single-TC v5e/v6e.
        target = _round_up(b8 // 2, 8)
    else:
        target = b8
    return max(8, min(batch_tile, target))


def actor_critic_forward(state, params, *, batch_tile=None, use_bf16=False):
    B, state_dim = state.shape
    if batch_tile is None:
        batch_tile = _default_batch_tile()
    TB = _pick_batch_tile(B, batch_tile)
    grid = (pl.cdiv(B, TB),)   # ragged last block handled by Pallas clipped DMAs

    # ---- flatten / fuse / pad weights --------------------------------------
    (w1, b1), (w2, b2) = params["feat"]
    (aw1, ab1), (aw2, ab2), (aw3, ab3), (aw4, ab4) = params["actor"]
    (cw1, cb1), (cw2, cb2) = params["critic"]

    # Fuse actor/critic first layers into one lane-full 128->128 matmul.
    wh1 = jnp.concatenate([aw1, cw1], axis=1)                  # (128, 128)
    bh1 = jnp.concatenate([ab1, cb1], axis=1)                  # (1, 128)
    # Zero-pad head second layers to K=128 so the whole h1 slab feeds both.
    aw2_p = jnp.concatenate(
        [aw2, jnp.zeros((64, aw2.shape[1]), aw2.dtype)], axis=0)  # (128, 32)
    cw2_p = jnp.concatenate(
        [jnp.zeros((64, cw2.shape[1]), cw2.dtype), cw2], axis=0)  # (128, 1)

    mats = [w1, w2, wh1, aw2_p, aw3, aw4, cw2_p]
    if use_bf16:
        mats = [m.astype(jnp.bfloat16) for m in mats]
    w1, w2, wh1, aw2_p, aw3, aw4, cw2_p = mats

    weights = [
        w1, b1, w2, b2,
        wh1, bh1,
        aw2_p, ab2, aw3, ab3, aw4, ab4,
        cw2_p, cb2,
    ]

    # ---- specs --------------------------------------------------------------
    state_spec = pl.BlockSpec((TB, state_dim), lambda i: (i, 0))
    # Weights/biases: whole-array blocks, constant index_map -> VMEM-resident.
    weight_specs = [pl.BlockSpec(w.shape, lambda i: (0, 0)) for w in weights]
    out_specs = (
        pl.BlockSpec((TB, 1), lambda i: (i, 0)),   # direction_mean
        pl.BlockSpec((TB, 1), lambda i: (i, 0)),   # value
    )
    out_shape = (
        jax.ShapeDtypeStruct((B, 1), jnp.float32),
        jax.ShapeDtypeStruct((B, 1), jnp.float32),
    )

    # ---- VMEM budget (derived from actual tile footprint) -------------------
    weight_bytes = sum(int(w.size) * w.dtype.itemsize for w in weights)
    act_cols = 256 + 128 + 128 + 32 + 16 + 2        # live intermediate columns
    vmem_limit = int(
        2 * weight_bytes                             # (possibly double-buffered) params
        + 2 * TB * state_dim * state.dtype.itemsize  # double-buffered state tile
        + 2 * 2 * TB * 4                             # double-buffered outputs
        + 4 * TB * act_cols * 4                      # intermediates + spill headroom
    )
    vmem_limit = min(max(vmem_limit, 4 * 1024 * 1024), 32 * 1024 * 1024)

    flops_per_row = 2 * (state_dim * 256 + 256 * 128 + 128 * 128
                         + 128 * 32 + 32 * 16 + 16 * 1 + 128 * 1)
    cost = pl.CostEstimate(
        flops=flops_per_row * B,
        transcendentals=B,                           # tanh
        bytes_accessed=weight_bytes
        + B * state_dim * state.dtype.itemsize
        + 2 * B * 4,
    )

    mean, value = pl.pallas_call(
        actor_critic_kernel,
        out_shape=out_shape,
        grid=grid,
        in_specs=[state_spec] + weight_specs,
        out_specs=out_specs,
        compiler_params=pltpu.CompilerParams(
            dimension_semantics=("parallel",),
            vmem_limit_bytes=vmem_limit,
        ),
        cost_estimate=cost,
    )(state, *weights)

    # std does not depend on state: compute outside the kernel.
    direction_std = jnp.broadcast_to(
        jnp.exp(params["log_std"]).reshape(1, 1), (B, 1)
    )
    return mean, direction_std, value


def actor_critic_ref(state, params):
    """Pure-JAX reference for validation (unfused, unpadded weights)."""
    def lin(x, wb, relu):
        w, b = wb
        y = x @ w + b
        return jnp.maximum(y, 0.0) if relu else y

    h = lin(state, params["feat"][0], True)
    f = lin(h, params["feat"][1], True)
    a = lin(f, params["actor"][0], True)
    a = lin(a, params["actor"][1], True)
    a = lin(a, params["actor"][2], True)
    a = lin(a, params["actor"][3], False)
    mean = jnp.tanh(a)
    std = jnp.broadcast_to(jnp.exp(params["log_std"]), mean.shape)
    c = lin(f, params["critic"][0], True)
    v = lin(c, params["critic"][1], False)
    return mean, std, v


if __name__ == "__main__":
    key = jax.random.PRNGKey(0)
    k_param, k_state = jax.random.split(key)

    state_dim = 16
    batch = 8
    params = init_params(k_param, state_dim)
    state = jax.random.normal(k_state, (batch, state_dim), jnp.float32)

    # Strict f32 path (default): must match the pure-JAX reference to 1e-5.
    mean, std, value = actor_critic_forward(state, params)
    jax.block_until_ready((mean, std, value))

    ref_mean, ref_std, ref_value = actor_critic_ref(state, params)
    assert mean.shape == (batch, 1) and std.shape == (batch, 1) and value.shape == (batch, 1)
    assert jnp.allclose(mean, ref_mean, atol=1e-5)
    assert jnp.allclose(std, ref_std, atol=1e-5)
    assert jnp.allclose(value, ref_value, atol=1e-5)

    # Exercise the multi-tile + ragged-last-block path (grid >= 2, B % TB != 0).
    batch2 = 20
    state2 = jax.random.normal(jax.random.PRNGKey(1), (batch2, state_dim), jnp.float32)
    mean2, std2, value2 = actor_critic_forward(state2, params)
    jax.block_until_ready((mean2, std2, value2))
    r_mean2, r_std2, r_value2 = actor_critic_ref(state2, params)
    assert mean2.shape == (batch2, 1) and value2.shape == (batch2, 1)
    assert jnp.allclose(mean2, r_mean2, atol=1e-5)
    assert jnp.allclose(value2, r_value2, atol=1e-5)

    # bf16 weight/activation path (f32 MXU accumulation): loose smoke tolerance.
    mean16, _, value16 = actor_critic_forward(state, params, use_bf16=True)
    jax.block_until_ready((mean16, value16))
    assert jnp.allclose(mean16, ref_mean, atol=1e-1)
    assert jnp.allclose(value16, ref_value, atol=1e-1)

    print("KERNEL_OK")
</pallas_src>

<mosaic_0001>
module attributes {stable_mosaic.version = 11 : i64} {
  func.func @actor_critic_kernel(%arg0: i32, %arg1: memref<8x16xf32, #tpu.memory_space<vmem>>, %arg2: memref<16x256xf32, #tpu.memory_space<vmem>>, %arg3: memref<1x256xf32, #tpu.memory_space<vmem>>, %arg4: memref<256x128xf32, #tpu.memory_space<vmem>>, %arg5: memref<1x128xf32, #tpu.memory_space<vmem>>, %arg6: memref<128x128xf32, #tpu.memory_space<vmem>>, %arg7: memref<1x128xf32, #tpu.memory_space<vmem>>, %arg8: memref<128x32xf32, #tpu.memory_space<vmem>>, %arg9: memref<1x32xf32, #tpu.memory_space<vmem>>, %arg10: memref<32x16xf32, #tpu.memory_space<vmem>>, %arg11: memref<1x16xf32, #tpu.memory_space<vmem>>, %arg12: memref<16x1xf32, #tpu.memory_space<vmem>>, %arg13: memref<1x1xf32, #tpu.memory_space<vmem>>, %arg14: memref<128x1xf32, #tpu.memory_space<vmem>>, %arg15: memref<1x1xf32, #tpu.memory_space<vmem>>, %arg16: memref<8x1xf32, #tpu.memory_space<vmem>>, %arg17: memref<8x1xf32, #tpu.memory_space<vmem>>) attributes {dimension_semantics = [#tpu.dimension_semantics<parallel>], iteration_bounds = array<i64: 1>, scalar_prefetch = 0 : i64, scratch_operands = 0 : i64, tpu.core_type = #tpu.core_type<tc>, window_params = [{transform_indices = @transform_0, window_bounds = array<i64: 8, 16>}, {pipeline_mode = #tpu.pipeline_mode<synchronous>, transform_indices = @transform_1, window_bounds = array<i64: 16, 256>}, {pipeline_mode = #tpu.pipeline_mode<synchronous>, transform_indices = @transform_2, window_bounds = array<i64: 1, 256>}, {pipeline_mode = #tpu.pipeline_mode<synchronous>, transform_indices = @transform_3, window_bounds = array<i64: 256, 128>}, {pipeline_mode = #tpu.pipeline_mode<synchronous>, transform_indices = @transform_4, window_bounds = array<i64: 1, 128>}, {pipeline_mode = #tpu.pipeline_mode<synchronous>, transform_indices = @transform_5, window_bounds = array<i64: 128, 128>}, {pipeline_mode = #tpu.pipeline_mode<synchronous>, transform_indices = @transform_6, window_bounds = array<i64: 1, 128>}, {pipeline_mode = #tpu.pipeline_mode<synchronous>, transform_indices = @transform_7, window_bounds = array<i64: 128, 32>}, {pipeline_mode = #tpu.pipeline_mode<synchronous>, transform_indices = @transform_8, window_bounds = array<i64: 1, 32>}, {pipeline_mode = #tpu.pipeline_mode<synchronous>, transform_indices = @transform_9, window_bounds = array<i64: 32, 16>}, {pipeline_mode = #tpu.pipeline_mode<synchronous>, transform_indices = @transform_10, window_bounds = array<i64: 1, 16>}, {pipeline_mode = #tpu.pipeline_mode<synchronous>, transform_indices = @transform_11, window_bounds = array<i64: 16, 1>}, {pipeline_mode = #tpu.pipeline_mode<synchronous>, transform_indices = @transform_12, window_bounds = array<i64: 1, 1>}, {pipeline_mode = #tpu.pipeline_mode<synchronous>, transform_indices = @transform_13, window_bounds = array<i64: 128, 1>}, {pipeline_mode = #tpu.pipeline_mode<synchronous>, transform_indices = @transform_14, window_bounds = array<i64: 1, 1>}, {transform_indices = @transform_15, window_bounds = array<i64: 8, 1>}, {transform_indices = @transform_16, window_bounds = array<i64: 8, 1>}]} {
    %c0 = arith.constant 0 : index
    %c0_0 = arith.constant 0 : index
    %0 = vector.load %arg1[%c0, %c0_0] : memref<8x16xf32, #tpu.memory_space<vmem>>, vector<8x16xf32>
    %c0_1 = arith.constant 0 : index
    %c0_2 = arith.constant 0 : index
    %1 = vector.load %arg2[%c0_1, %c0_2] : memref<16x256xf32, #tpu.memory_space<vmem>>, vector<16x256xf32>
    %cst = arith.constant dense<0.000000e+00> : vector<8x256xf32>
    %2 = tpu.matmul %0, %1, %cst {dimension_numbers = #tpu.dot_dimension_numbers<[1], [0], [0], [1], [0, 0, 1, 1], [], []>} : vector<8x16xf32>, vector<16x256xf32>, vector<8x256xf32> -> vector<8x256xf32>
    %c0_3 = arith.constant 0 : index
    %c0_4 = arith.constant 0 : index
    %3 = vector.load %arg3[%c0_3, %c0_4] : memref<1x256xf32, #tpu.memory_space<vmem>>, vector<1x256xf32>
    %4 = vector.broadcast %3 : vector<1x256xf32> to vector<8x256xf32>
    %5 = arith.addf %2, %4 : vector<8x256xf32>
    %cst_5 = arith.constant 0.000000e+00 : f32
    %6 = vector.broadcast %cst_5 : f32 to vector<8x256xf32>
    %7 = arith.maximumf %5, %6 : vector<8x256xf32>
    %c0_6 = arith.constant 0 : index
    %c0_7 = arith.constant 0 : index
    %8 = vector.load %arg4[%c0_6, %c0_7] : memref<256x128xf32, #tpu.memory_space<vmem>>, vector<256x128xf32>
    %cst_8 = arith.constant dense<0.000000e+00> : vector<8x128xf32>
    %9 = tpu.matmul %7, %8, %cst_8 {dimension_numbers = #tpu.dot_dimension_numbers<[1], [0], [0], [1], [0, 0, 1, 1], [], []>} : vector<8x256xf32>, vector<256x128xf32>, vector<8x128xf32> -> vector<8x128xf32>
    %c0_9 = arith.constant 0 : index
    %c0_10 = arith.constant 0 : index
    %10 = vector.load %arg5[%c0_9, %c0_10] : memref<1x128xf32, #tpu.memory_space<vmem>>, vector<1x128xf32>
    %11 = vector.broadcast %10 : vector<1x128xf32> to vector<8x128xf32>
    %12 = arith.addf %9, %11 : vector<8x128xf32>
    %cst_11 = arith.constant 0.000000e+00 : f32
    %13 = vector.broadcast %cst_11 : f32 to vector<8x128xf32>
    %14 = arith.maximumf %12, %13 : vector<8x128xf32>
    %c0_12 = arith.constant 0 : index
    %c0_13 = arith.constant 0 : index
    %15 = vector.load %arg6[%c0_12, %c0_13] : memref<128x128xf32, #tpu.memory_space<vmem>>, vector<128x128xf32>
    %cst_14 = arith.constant dense<0.000000e+00> : vector<8x128xf32>
    %16 = tpu.matmul %14, %15, %cst_14 {dimension_numbers = #tpu.dot_dimension_numbers<[1], [0], [0], [1], [0, 0, 1, 1], [], []>} : vector<8x128xf32>, vector<128x128xf32>, vector<8x128xf32> -> vector<8x128xf32>
    %c0_15 = arith.constant 0 : index
    %c0_16 = arith.constant 0 : index
    %17 = vector.load %arg7[%c0_15, %c0_16] : memref<1x128xf32, #tpu.memory_space<vmem>>, vector<1x128xf32>
    %18 = vector.broadcast %17 : vector<1x128xf32> to vector<8x128xf32>
    %19 = arith.addf %16, %18 : vector<8x128xf32>
    %cst_17 = arith.constant 0.000000e+00 : f32
    %20 = vector.broadcast %cst_17 : f32 to vector<8x128xf32>
    %21 = arith.maximumf %19, %20 : vector<8x128xf32>
    %c0_18 = arith.constant 0 : index
    %c0_19 = arith.constant 0 : index
    %22 = vector.load %arg8[%c0_18, %c0_19] : memref<128x32xf32, #tpu.memory_space<vmem>>, vector<128x32xf32>
    %cst_20 = arith.constant dense<0.000000e+00> : vector<8x32xf32>
    %23 = tpu.matmul %21, %22, %cst_20 {dimension_numbers = #tpu.dot_dimension_numbers<[1], [0], [0], [1], [0, 0, 1, 1], [], []>} : vector<8x128xf32>, vector<128x32xf32>, vector<8x32xf32> -> vector<8x32xf32>
    %c0_21 = arith.constant 0 : index
    %c0_22 = arith.constant 0 : index
    %24 = vector.load %arg9[%c0_21, %c0_22] : memref<1x32xf32, #tpu.memory_space<vmem>>, vector<1x32xf32>
    %25 = vector.broadcast %24 : vector<1x32xf32> to vector<8x32xf32>
    %26 = arith.addf %23, %25 : vector<8x32xf32>
    %cst_23 = arith.constant 0.000000e+00 : f32
    %27 = vector.broadcast %cst_23 : f32 to vector<8x32xf32>
    %28 = arith.maximumf %26, %27 : vector<8x32xf32>
    %c0_24 = arith.constant 0 : index
    %c0_25 = arith.constant 0 : index
    %29 = vector.load %arg10[%c0_24, %c0_25] : memref<32x16xf32, #tpu.memory_space<vmem>>, vector<32x16xf32>
    %cst_26 = arith.constant dense<0.000000e+00> : vector<8x16xf32>
    %30 = tpu.matmul %28, %29, %cst_26 {dimension_numbers = #tpu.dot_dimension_numbers<[1], [0], [0], [1], [0, 0, 1, 1], [], []>} : vector<8x32xf32>, vector<32x16xf32>, vector<8x16xf32> -> vector<8x16xf32>
    %c0_27 = arith.constant 0 : index
    %c0_28 = arith.constant 0 : index
    %31 = vector.load %arg11[%c0_27, %c0_28] : memref<1x16xf32, #tpu.memory_space<vmem>>, vector<1x16xf32>
    %32 = vector.broadcast %31 : vector<1x16xf32> to vector<8x16xf32>
    %33 = arith.addf %30, %32 : vector<8x16xf32>
    %cst_29 = arith.constant 0.000000e+00 : f32
    %34 = vector.broadcast %cst_29 : f32 to vector<8x16xf32>
    %35 = arith.maximumf %33, %34 : vector<8x16xf32>
    %c0_30 = arith.constant 0 : index
    %c0_31 = arith.constant 0 : index
    %36 = vector.load %arg12[%c0_30, %c0_31] : memref<16x1xf32, #tpu.memory_space<vmem>>, vector<16x1xf32>
    %cst_32 = arith.constant dense<0.000000e+00> : vector<8x1xf32>
    %37 = tpu.matmul %35, %36, %cst_32 {dimension_numbers = #tpu.dot_dimension_numbers<[1], [0], [0], [1], [0, 0, 1, 1], [], []>} : vector<8x16xf32>, vector<16x1xf32>, vector<8x1xf32> -> vector<8x1xf32>
    %c0_33 = arith.constant 0 : index
    %c0_34 = arith.constant 0 : index
    %38 = vector.load %arg13[%c0_33, %c0_34] : memref<1x1xf32, #tpu.memory_space<vmem>>, vector<1x1xf32>
    %39 = vector.broadcast %38 : vector<1x1xf32> to vector<8x1xf32>
    %40 = arith.addf %37, %39 : vector<8x1xf32>
    %41 = math.tanh %40 : vector<8x1xf32>
    %c0_35 = arith.constant 0 : index
    %c0_36 = arith.constant 0 : index
    %42 = vector.load %arg16[%c0_35, %c0_36] : memref<8x1xf32, #tpu.memory_space<vmem>>, vector<8x1xf32>
    tpu.vector_store %arg16[%c0_35, %c0_36], %41 {strides = array<i32>} : memref<8x1xf32, #tpu.memory_space<vmem>>, vector<8x1xf32>,
    %c0_37 = arith.constant 0 : index
    %c0_38 = arith.constant 0 : index
    %43 = vector.load %arg14[%c0_37, %c0_38] : memref<128x1xf32, #tpu.memory_space<vmem>>, vector<128x1xf32>
    %cst_39 = arith.constant dense<0.000000e+00> : vector<8x1xf32>
    %44 = tpu.matmul %21, %43, %cst_39 {dimension_numbers = #tpu.dot_dimension_numbers<[1], [0], [0], [1], [0, 0, 1, 1], [], []>} : vector<8x128xf32>, vector<128x1xf32>, vector<8x1xf32> -> vector<8x1xf32>
    %c0_40 = arith.constant 0 : index
    %c0_41 = arith.constant 0 : index
    %45 = vector.load %arg15[%c0_40, %c0_41] : memref<1x1xf32, #tpu.memory_space<vmem>>, vector<1x1xf32>
    %46 = vector.broadcast %45 : vector<1x1xf32> to vector<8x1xf32>
    %47 = arith.addf %44, %46 : vector<8x1xf32>
    %c0_42 = arith.constant 0 : index
    %c0_43 = arith.constant 0 : index
    %48 = vector.load %arg17[%c0_42, %c0_43] : memref<8x1xf32, #tpu.memory_space<vmem>>, vector<8x1xf32>
    tpu.vector_store %arg17[%c0_42, %c0_43], %47 {strides = array<i32>} : memref<8x1xf32, #tpu.memory_space<vmem>>, vector<8x1xf32>,
    return
  }
  func.func @transform_0(%arg0: i32) -> (i32, i32) {
    %c0_i32 = arith.constant 0 : i32
    %c0_i32_0 = arith.constant 0 : i32
    return %arg0, %c0_i32 : i32, i32
  }
  func.func @transform_1(%arg0: i32) -> (i32, i32) {
    %c0_i32 = arith.constant 0 : i32
    %c0_i32_0 = arith.constant 0 : i32
    %c0_i32_1 = arith.constant 0 : i32
    return %c0_i32, %c0_i32_0 : i32, i32
  }
  func.func @transform_2(%arg0: i32) -> (i32, i32) {
    %c0_i32 = arith.constant 0 : i32
    %c0_i32_0 = arith.constant 0 : i32
    %c0_i32_1 = arith.constant 0 : i32
    return %c0_i32, %c0_i32_0 : i32, i32
  }
  func.func @transform_3(%arg0: i32) -> (i32, i32) {
    %c0_i32 = arith.constant 0 : i32
    %c0_i32_0 = arith.constant 0 : i32
    %c0_i32_1 = arith.constant 0 : i32
    return %c0_i32, %c0_i32_0 : i32, i32
  }
  func.func @transform_4(%arg0: i32) -> (i32, i32) {
    %c0_i32 = arith.constant 0 : i32
    %c0_i32_0 = arith.constant 0 : i32
    %c0_i32_1 = arith.constant 0 : i32
    return %c0_i32, %c0_i32_0 : i32, i32
  }
  func.func @transform_5(%arg0: i32) -> (i32, i32) {
    %c0_i32 = arith.constant 0 : i32
    %c0_i32_0 = arith.constant 0 : i32
    %c0_i32_1 = arith.constant 0 : i32
    return %c0_i32, %c0_i32_0 : i32, i32
  }
  func.func @transform_6(%arg0: i32) -> (i32, i32) {
    %c0_i32 = arith.constant 0 : i32
    %c0_i32_0 = arith.constant 0 : i32
    %c0_i32_1 = arith.constant 0 : i32
    return %c0_i32, %c0_i32_0 : i32, i32
  }
  func.func @transform_7(%arg0: i32) -> (i32, i32) {
    %c0_i32 = arith.constant 0 : i32
    %c0_i32_0 = arith.constant 0 : i32
    %c0_i32_1 = arith.constant 0 : i32
    return %c0_i32, %c0_i32_0 : i32, i32
  }
  func.func @transform_8(%arg0: i32) -> (i32, i32) {
    %c0_i32 = arith.constant 0 : i32
    %c0_i32_0 = arith.constant 0 : i32
    %c0_i32_1 = arith.constant 0 : i32
    return %c0_i32, %c0_i32_0 : i32, i32
  }
  func.func @transform_9(%arg0: i32) -> (i32, i32) {
    %c0_i32 = arith.constant 0 : i32
    %c0_i32_0 = arith.constant 0 : i32
    %c0_i32_1 = arith.constant 0 : i32
    return %c0_i32, %c0_i32_0 : i32, i32
  }
  func.func @transform_10(%arg0: i32) -> (i32, i32) {
    %c0_i32 = arith.constant 0 : i32
    %c0_i32_0 = arith.constant 0 : i32
    %c0_i32_1 = arith.constant 0 : i32
    return %c0_i32, %c0_i32_0 : i32, i32
  }
  func.func @transform_11(%arg0: i32) -> (i32, i32) {
    %c0_i32 = arith.constant 0 : i32
    %c0_i32_0 = arith.constant 0 : i32
    %c0_i32_1 = arith.constant 0 : i32
    return %c0_i32, %c0_i32_0 : i32, i32
  }
  func.func @transform_12(%arg0: i32) -> (i32, i32) {
    %c0_i32 = arith.constant 0 : i32
    %c0_i32_0 = arith.constant 0 : i32
    %c0_i32_1 = arith.constant 0 : i32
    return %c0_i32, %c0_i32_0 : i32, i32
  }
  func.func @transform_13(%arg0: i32) -> (i32, i32) {
    %c0_i32 = arith.constant 0 : i32
    %c0_i32_0 = arith.constant 0 : i32
    %c0_i32_1 = arith.constant 0 : i32
    return %c0_i32, %c0_i32_0 : i32, i32
  }
  func.func @transform_14(%arg0: i32) -> (i32, i32) {
    %c0_i32 = arith.constant 0 : i32
    %c0_i32_0 = arith.constant 0 : i32
    %c0_i32_1 = arith.constant 0 : i32
    return %c0_i32, %c0_i32_0 : i32, i32
  }
  func.func @transform_15(%arg0: i32) -> (i32, i32) {
    %c0_i32 = arith.constant 0 : i32
    %c0_i32_0 = arith.constant 0 : i32
    return %arg0, %c0_i32 : i32, i32
  }
  func.func @transform_16(%arg0: i32) -> (i32, i32) {
    %c0_i32 = arith.constant 0 : i32
    %c0_i32_0 = arith.constant 0 : i32
    return %arg0, %c0_i32 : i32, i32
  }
}

</mosaic_0001>

<llo_original>
// kernel: tpu_custom_call.1
$region0: #{tpu_custom_call.1}
  #allocation0 [shape = 'u32[]', space=smem, size = 0x4, offset = 0x4, fixed_abs, tag = 'smem constant byte address 0x4 - core index']
  #allocation1 [shape = 'u32[144,128]{1,0:T(1,128)}', space=vmem, size = 0x12000, scoped, tag = 'internal scratch']
  #allocation2 [shape = 'f32[1,1]{1,0:T(1,128)S(1)}', space=vmem, size = 0x200, scoped, tag = 'scoped memory for tpu_custom_call.1']
  #allocation3 [shape = 'f32[1,1]{1,0:T(1,128)S(1)}', space=vmem, size = 0x200, scoped, tag = 'scoped memory for tpu_custom_call.1']
  %s0 = inlined_call_operand.vmem [shape: f32[8,16], index: 0, kind: input, shape index: {}]
  %s1 = inlined_call_operand.vmem [shape: f32[16,256], index: 1, kind: input, shape index: {}]
  %s2 = inlined_call_operand.vmem [shape: f32[1,256], index: 2, kind: input, shape index: {}]
  %s3 = inlined_call_operand.vmem [shape: f32[256,128], index: 3, kind: input, shape index: {}]
  %s4 = inlined_call_operand.vmem [shape: f32[1,128], index: 4, kind: input, shape index: {}]
  %s5 = inlined_call_operand.hbm [shape: f32[128,128], index: 5, kind: input, shape index: {}]
  %s6 = inlined_call_operand.vmem [shape: f32[1,128], index: 6, kind: input, shape index: {}]
  %s7 = inlined_call_operand.vmem [shape: f32[128,32], index: 7, kind: input, shape index: {}]
  %s8 = inlined_call_operand.vmem [shape: f32[1,32], index: 8, kind: input, shape index: {}]
  %s9 = inlined_call_operand.vmem [shape: f32[32,16], index: 9, kind: input, shape index: {}]
  %s10 = inlined_call_operand.vmem [shape: f32[1,16], index: 10, kind: input, shape index: {}]
  %s11 = inlined_call_operand.vmem [shape: f32[16,1], index: 11, kind: input, shape index: {}]
  %s12 = inlined_call_operand.<no memory space> [shape: f32[1,1], index: 12, kind: input, shape index: {}]
  %s13 = inlined_call_operand.vmem [shape: f32[128,1], index: 13, kind: input, shape index: {}]
  %s14 = inlined_call_operand.<no memory space> [shape: f32[1,1], index: 14, kind: input, shape index: {}]
  %s15 = inlined_call_operand.vmem [shape: f32[8,1], index: 15, kind: output, shape index: {0}]
  %s16 = inlined_call_operand.vmem [shape: f32[8,1], index: 16, kind: output, shape index: {1}]
  %17 = xla_tuple %s15, %s16
  %s18 = sld [smem:[#allocation0]]
  $region82: #{tpu_custom_call.1} parent=0
    _
  %s20 = ssub.s32 1, %s18
  %s21 = scalar_select 0, %s20, %s18
  %v22 = vstv %s12
  %23 = vst [vmem:[#allocation2] sm:$0x1] %v22
  %v24 = vstv %s14
  %25 = vst [vmem:[#allocation3] sm:$0x1] %v24
  $region1: #{tpu_custom_call.1} parent=0
    #allocation4 [shape = 'u8[65536]{0}', space=vmem, size = 0x10000, scoped, tag = 'input window, operand 5, single buffered']
    #allocation5 [shape = 's32[1]{0}', space=sflag, size = 0x4, scoped, tag = 'scoped memory for tpu_custom_call.1']
    %26 = vsyncpa [#allocation5], 0
    // Predicated region
    $region2: #{tpu_custom_call.1} parent=1 // pred_check
      _
    $region3: #{tpu_custom_call.1} parent=1 // pred_check_branch
      %28 = sbr.rel (0) target = $region5
    $region4: #{tpu_custom_call.1} parent=1 // pred_region
      _
    $region5: #{tpu_custom_call.1} parent=1 // pred_fallthru
      _
    // Predicated region
    $region6: #{tpu_custom_call.1} parent=1 // pred_check
      _
    $region7: #{tpu_custom_call.1} parent=1 // pred_check_branch
      %30 = sbr.rel (0) target = $region9
    $region8: #{tpu_custom_call.1} parent=1 // pred_region
      _
    $region9: #{tpu_custom_call.1} parent=1 // pred_fallthru
      _
    // Predicated region
    $region10: #{tpu_custom_call.1} parent=1 // pred_check
      _
    $region11: #{tpu_custom_call.1} parent=1 // pred_check_branch
      %32 = sbr.rel (0) target = $region13
    $region12: #{tpu_custom_call.1} parent=1 // pred_region
      _
    $region13: #{tpu_custom_call.1} parent=1 // pred_fallthru
      _
    // Predicated region
    $region14: #{tpu_custom_call.1} parent=1 // pred_check
      _
    $region15: #{tpu_custom_call.1} parent=1 // pred_check_branch
      %34 = sbr.rel (0) target = $region17
    $region16: #{tpu_custom_call.1} parent=1 // pred_region
      _
    $region17: #{tpu_custom_call.1} parent=1 // pred_fallthru
      _
    // Predicated region
    $region18: #{tpu_custom_call.1} parent=1 // pred_check
      _
    $region19: #{tpu_custom_call.1} parent=1 // pred_check_branch
      %36 = sbr.rel (0) target = $region21
    $region20: #{tpu_custom_call.1} parent=1 // pred_region
      _
    $region21: #{tpu_custom_call.1} parent=1 // pred_fallthru
      _
    // Predicated region
    $region22: #{tpu_custom_call.1} parent=1 // pred_check
      _
    $region23: #{tpu_custom_call.1} parent=1 // pred_check_branch
      %38 = sbr.rel (0) target = $region25
    $region24: #{tpu_custom_call.1} parent=1 // pred_region
      %s40 = ssub.s32 2048, 2048
      %41 = vsyncadd [#allocation5], %s40
      %s42 = sshll.u32 [#allocation4], 4
      %s43 = int_to_ptr.vmem [resolvable:$true] %s42
      %48 = dma.hbm_to_vmem [thread:$0]  %s5, 2048, %s43, [#allocation5], 128, 128, 8
    $region25: #{tpu_custom_call.1} parent=1 // pred_fallthru
      _
    // Predicated region
    $region26: #{tpu_custom_call.1} parent=1 // pred_check
      _
    $region27: #{tpu_custom_call.1} parent=1 // pred_check_branch
      %50 = sbr.rel (0) target = $region29
    $region28: #{tpu_custom_call.1} parent=1 // pred_region
      _
    $region29: #{tpu_custom_call.1} parent=1 // pred_fallthru
      _
    // Predicated region
    $region30: #{tpu_custom_call.1} parent=1 // pred_check
      _
    $region31: #{tpu_custom_call.1} parent=1 // pred_check_branch
      %52 = sbr.rel (0) target = $region33
    $region32: #{tpu_custom_call.1} parent=1 // pred_region
      _
    $region33: #{tpu_custom_call.1} parent=1 // pred_fallthru
      _
    // Predicated region
    $region34: #{tpu_custom_call.1} parent=1 // pred_check
      _
    $region35: #{tpu_custom_call.1} parent=1 // pred_check_branch
      %54 = sbr.rel (0) target = $region37
    $region36: #{tpu_custom_call.1} parent=1 // pred_region
      _
    $region37: #{tpu_custom_call.1} parent=1 // pred_fallthru
      _
    // Predicated region
    $region38: #{tpu_custom_call.1} parent=1 // pred_check
      _
    $region39: #{tpu_custom_call.1} parent=1 // pred_check_branch
      %56 = sbr.rel (0) target = $region41
    $region40: #{tpu_custom_call.1} parent=1 // pred_region
      _
    $region41: #{tpu_custom_call.1} parent=1 // pred_fallthru
      _
    // Predicated region
    $region42: #{tpu_custom_call.1} parent=1 // pred_check
      _
    $region43: #{tpu_custom_call.1} parent=1 // pred_check_branch
      %58 = sbr.rel (0) target = $region45
    $region44: #{tpu_custom_call.1} parent=1 // pred_region
      _
    $region45: #{tpu_custom_call.1} parent=1 // pred_fallthru
      _
    // Predicated region
    $region46: #{tpu_custom_call.1} parent=1 // pred_check
      _
    $region47: #{tpu_custom_call.1} parent=1 // pred_check_branch
      %60 = sbr.rel (0) target = $region49
    $region48: #{tpu_custom_call.1} parent=1 // pred_region
      _
    $region49: #{tpu_custom_call.1} parent=1 // pred_fallthru
      _
    // Predicated region
    $region50: #{tpu_custom_call.1} parent=1 // pred_check
      _
    $region51: #{tpu_custom_call.1} parent=1 // pred_check_branch
      %62 = sbr.rel (0) target = $region53
    $region52: #{tpu_custom_call.1} parent=1 // pred_region
      _
    $region53: #{tpu_custom_call.1} parent=1 // pred_fallthru
      _
    // Predicated region
    $region54: #{tpu_custom_call.1} parent=1 // pred_check
      _
    $region55: #{tpu_custom_call.1} parent=1 // pred_check_branch
      %64 = sbr.rel (0) target = $region57
    $region56: #{tpu_custom_call.1} parent=1 // pred_region
      _
    $region57: #{tpu_custom_call.1} parent=1 // pred_fallthru
      _
    // Predicated region
    $region58: #{tpu_custom_call.1} parent=1 // pred_check
      _
    $region59: #{tpu_custom_call.1} parent=1 // pred_check_branch
      %66 = sbr.rel (0) target = $region61
    $region60: #{tpu_custom_call.1} parent=1 // pred_region
      _
    $region61: #{tpu_custom_call.1} parent=1 // pred_fallthru
      _
    // Predicated region
    $region62: #{tpu_custom_call.1} parent=1 // pred_check
      _
    $region63: #{tpu_custom_call.1} parent=1 // pred_check_branch
      %68 = sbr.rel (0) target = $region65
    $region64: #{tpu_custom_call.1} parent=1 // pred_region
      %69 = dma.done [#allocation5], 2048
    $region65: #{tpu_custom_call.1} parent=1 // pred_fallthru
      _
    %v70 = vld [vmem:[%s0] sm:$0xff]
    %v71 = vld [vmem:[%s1] sm:$0xff]
    %v72 = vld [vmem:[%s1 + $0x8] sm:$0xff]
    %v73 = vld [vmem:[%s1 + $0x10] sm:$0xff]
    %v74 = vld [vmem:[%s1 + $0x18] sm:$0xff]
    %v75 = vld [vmem:[%s2] sm:$0x3]
    %v77 = vlaneseq
    %v78 = vshrl.u32 %v77, 7
    %v79 = vsub.s32 0, %v78
    %v80 = vrot.slane %v75, %v79
    %v81 = vlaneseq
    %v82 = vshrl.u32 %v81, 7
    %v83 = vsub.s32 1, %v82
    %v84 = vrot.slane %v75, %v83
    %vm87 = vcmask 130048
    %v89 = vsel %vm87, %v70, 0
    %91 = vmatprep.subr.mxu0 %v72
    %92 = vmatpush1.msra.mxu0 %v71
    %93 = vmatprep.subr.mxu0 %v74
    %94 = vmatpush1.msra.mxu0 %v73
    %95 = vmatprep.subr.mxu0 0.0
    %96 = vmatpush1.msra.mxu0 0.0
    %97 = vmatprep.subr.mxu0 0.0
    %98 = vmatpush1.msra.mxu0 0.0
    %99 = vmatprep.subr.mxu0 0.0
    %100 = vmatpush1.msra.mxu0 0.0
    %101 = vmatprep.subr.mxu0 0.0
    %102 = vmatpush1.msra.mxu0 0.0
    %103 = vmatprep.subr.mxu0 0.0
    %104 = vmatpush1.msra.mxu0 0.0
    %105 = vmatprep.subr.mxu0 0.0
    %106 = vmatpush1.msra.mxu0 0.0
    %107 = vmatprep.subr.mxu0 0.0
    %108 = vmatpush1.msra.mxu0 0.0
    %109 = vmatprep.subr.mxu0 0.0
    %110 = vmatpush1.msra.mxu0 0.0
    %111 = vmatprep.subr.mxu0 0.0
    %112 = vmatpush1.msra.mxu0 0.0
    %113 = vmatprep.subr.mxu0 0.0
    %114 = vmatpush1.msra.mxu0 0.0
    %115 = vmatprep.subr.mxu0 0.0
    %116 = vmatpush1.msra.mxu0 0.0
    %117 = vmatprep.subr.mxu0 0.0
    %118 = vmatpush1.msra.mxu0 0.0
    %119 = vmatprep.subr.mxu0 0.0
    %120 = vmatpush1.msra.mxu0 0.0
    %121 = vmatprep.subr.mxu0 0.0
    %122 = vmatpush1.msra.mxu0 0.0
    %123 = vmatprep.subr.mxu0 0.0
    %124 = vmatpush1.msra.mxu0 0.0
    %125 = vmatprep.subr.mxu0 0.0
    %126 = vmatpush1.msra.mxu0 0.0
    %127 = vmatprep.subr.mxu0 0.0
    %128 = vmatpush1.msra.mxu0 0.0
    %129 = vmatprep.subr.mxu0 0.0
    %130 = vmatpush1.msra.mxu0 0.0
    %131 = vmatprep.subr.mxu0 0.0
    %132 = vmatpush1.msra.mxu0 0.0
    %133 = vmatprep.subr.mxu0 0.0
    %134 = vmatpush1.msra.mxu0 0.0
    %135 = vmatprep.subr.mxu0 0.0
    %136 = vmatpush1.msra.mxu0 0.0
    %137 = vmatprep.subr.mxu0 0.0
    %138 = vmatpush1.msra.mxu0 0.0
    %139 = vmatprep.subr.mxu0 0.0
    %140 = vmatpush1.msra.mxu0 0.0
    %141 = vmatprep.subr.mxu0 0.0
    %142 = vmatpush1.msra.mxu0 0.0
    %143 = vmatprep.subr.mxu0 0.0
    %144 = vmatpush1.msra.mxu0 0.0
    %145 = vmatprep.subr.mxu0 0.0
    %146 = vmatpush1.msra.mxu0 0.0
    %147 = vmatprep.subr.mxu0 0.0
    %148 = vmatpush1.msra.mxu0 0.0
    %149 = vmatprep.subr.mxu0 0.0
    %150 = vmatpush1.msra.mxu0 0.0
    %151 = vmatprep.subr.mxu0 0.0
    %152 = vmatpush1.msra.mxu0 0.0
    %153 = vmatprep.subr.mxu0 0.0
    %154 = vmatpush1.msra.mxu0 0.0
    %155 = vmatprep.mubr.f32.mxu0 0.0
    %156 = vmatmul.mubr.f32.gmra.mrb[0].mxu0 %v89
    %v157 = vpop.f32.mrb[0].mxu0
    %v158 = vadd.f32 %v80, %v157
    %v159 = vpop.f32.mrb[0].mxu0
    %v160 = vadd.f32 %v84, %v159
    %161 = vdwg.mxu0
    %v162 = vmax.f32 %v158, 0.0
    %v163 = vmax.f32 %v160, 0.0
    %v164 = vld [vmem:[%s3] sm:$0xff]
    %v165 = vld [vmem:[%s3 + $0x8] sm:$0xff]
    %v166 = vld [vmem:[%s3 + $0x10] sm:$0xff]
    %v167 = vld [vmem:[%s3 + $0x18] sm:$0xff]
    %v168 = vld [vmem:[%s3 + $0x20] sm:$0xff]
    %v169 = vld [vmem:[%s3 + $0x28] sm:$0xff]
    %v170 = vld [vmem:[%s3 + $0x30] sm:$0xff]
    %v171 = vld [vmem:[%s3 + $0x38] sm:$0xff]
    %v172 = vld [vmem:[%s3 + $0x40] sm:$0xff]
    %v173 = vld [vmem:[%s3 + $0x48] sm:$0xff]
    %v174 = vld [vmem:[%s3 + $0x50] sm:$0xff]
    %v175 = vld [vmem:[%s3 + $0x58] sm:$0xff]
    %v176 = vld [vmem:[%s3 + $0x60] sm:$0xff]
    %v177 = vld [vmem:[%s3 + $0x68] sm:$0xff]
    %v178 = vld [vmem:[%s3 + $0x70] sm:$0xff]
    %v179 = vld [vmem:[%s3 + $0x78] sm:$0xff]
    %v180 = vld [vmem:[%s3 + $0x80] sm:$0xff]
    %v181 = vld [vmem:[%s3 + $0x88] sm:$0xff]
    %v182 = vld [vmem:[%s3 + $0x90] sm:$0xff]
    %v183 = vld [vmem:[%s3 + $0x98] sm:$0xff]
    %v184 = vld [vmem:[%s3 + $0xa0] sm:$0xff]
    %v185 = vld [vmem:[%s3 + $0xa8] sm:$0xff]
    %v186 = vld [vmem:[%s3 + $0xb0] sm:$0xff]
    %v187 = vld [vmem:[%s3 + $0xb8] sm:$0xff]
    %v188 = vld [vmem:[%s3 + $0xc0] sm:$0xff]
    %v189 = vld [vmem:[%s3 + $0xc8] sm:$0xff]
    %v190 = vld [vmem:[%s3 + $0xd0] sm:$0xff]
    %v191 = vld [vmem:[%s3 + $0xd8] sm:$0xff]
    %v192 = vld [vmem:[%s3 + $0xe0] sm:$0xff]
    %v193 = vld [vmem:[%s3 + $0xe8] sm:$0xff]
    %v194 = vld [vmem:[%s3 + $0xf0] sm:$0xff]
    %v195 = vld [vmem:[%s3 + $0xf8] sm:$0xff]
    %v196 = vld [vmem:[%s4] sm:$0x1]
    %v198 = vlaneseq
    %v199 = vshrl.u32 %v198, 7
    %v200 = vsub.s32 0, %v199
    %v201 = vrot.slane %v196, %v200
    %203 = vmatprep.subr.mxu0 0.0
    %204 = vmatpush1.msra.mxu0 %v164
    %205 = vmatprep.subr.mxu0 0.0
    %206 = vmatpush1.msra.mxu0 %v165
    %207 = vmatprep.subr.mxu0 0.0
    %208 = vmatpush1.msra.mxu0 %v166
    %209 = vmatprep.subr.mxu0 0.0
    %210 = vmatpush1.msra.mxu0 %v167
    %211 = vmatprep.subr.mxu0 0.0
    %212 = vmatpush1.msra.mxu0 %v168
    %213 = vmatprep.subr.mxu0 0.0
    %214 = vmatpush1.msra.mxu0 %v169
    %215 = vmatprep.subr.mxu0 0.0
    %216 = vmatpush1.msra.mxu0 %v170
    %217 = vmatprep.subr.mxu0 0.0
    %218 = vmatpush1.msra.mxu0 %v171
    %219 = vmatprep.subr.mxu0 0.0
    %220 = vmatpush1.msra.mxu0 %v172
    %221 = vmatprep.subr.mxu0 0.0
    %222 = vmatpush1.msra.mxu0 %v173
    %223 = vmatprep.subr.mxu0 0.0
    %224 = vmatpush1.msra.mxu0 %v174
    %225 = vmatprep.subr.mxu0 0.0
    %226 = vmatpush1.msra.mxu0 %v175
    %227 = vmatprep.subr.mxu0 0.0
    %228 = vmatpush1.msra.mxu0 %v176
    %229 = vmatprep.subr.mxu0 0.0
    %230 = vmatpush1.msra.mxu0 %v177
    %231 = vmatprep.subr.mxu0 0.0
    %232 = vmatpush1.msra.mxu0 %v178
    %233 = vmatprep.subr.mxu0 0.0
    %234 = vmatpush1.msra.mxu0 %v179
    %235 = vmatprep.subr.mxu0 0.0
    %236 = vmatpush1.msra.mxu0 %v180
    %237 = vmatprep.subr.mxu0 0.0
    %238 = vmatpush1.msra.mxu0 %v181
    %239 = vmatprep.subr.mxu0 0.0
    %240 = vmatpush1.msra.mxu0 %v182
    %241 = vmatprep.subr.mxu0 0.0
    %242 = vmatpush1.msra.mxu0 %v183
    %243 = vmatprep.subr.mxu0 0.0
    %244 = vmatpush1.msra.mxu0 %v184
    %245 = vmatprep.subr.mxu0 0.0
    %246 = vmatpush1.msra.mxu0 %v185
    %247 = vmatprep.subr.mxu0 0.0
    %248 = vmatpush1.msra.mxu0 %v186
    %249 = vmatprep.subr.mxu0 0.0
    %250 = vmatpush1.msra.mxu0 %v187
    %251 = vmatprep.subr.mxu0 0.0
    %252 = vmatpush1.msra.mxu0 %v188
    %253 = vmatprep.subr.mxu0 0.0
    %254 = vmatpush1.msra.mxu0 %v189
    %255 = vmatprep.subr.mxu0 0.0
    %256 = vmatpush1.msra.mxu0 %v190
    %257 = vmatprep.subr.mxu0 0.0
    %258 = vmatpush1.msra.mxu0 %v191
    %259 = vmatprep.subr.mxu0 0.0
    %260 = vmatpush1.msra.mxu0 %v192
    %261 = vmatprep.subr.mxu0 0.0
    %262 = vmatpush1.msra.mxu0 %v193
    %263 = vmatprep.subr.mxu0 0.0
    %264 = vmatpush1.msra.mxu0 %v194
    %265 = vmatprep.subr.mxu0 0.0
    %266 = vmatpush1.msra.mxu0 %v195
    %267 = vmatprep.mubr.f32.mxu0 %v163
    %268 = vmatmul.mubr.f32.gmra.mrb[0].mxu0 %v162
    %v269 = vpop.f32.mrb[0].mxu0
    %v270 = vadd.f32 %v201, %v269
    %v271 = vpop.f32.mrb[0].mxu0
    %272 = vdwg.mxu0
    %v273 = vmax.f32 %v270, 0.0
    %v274 = vld [vmem:[#allocation4] sm:$0xff]
    %v275 = vld [vmem:[#allocation4 + $0x8] sm:$0xff]
    %v276 = vld [vmem:[#allocation4 + $0x10] sm:$0xff]
    %v277 = vld [vmem:[#allocation4 + $0x18] sm:$0xff]
    %v278 = vld [vmem:[#allocation4 + $0x20] sm:$0xff]
    %v279 = vld [vmem:[#allocation4 + $0x28] sm:$0xff]
    %v280 = vld [vmem:[#allocation4 + $0x30] sm:$0xff]
    %v281 = vld [vmem:[#allocation4 + $0x38] sm:$0xff]
    %v282 = vld [vmem:[#allocation4 + $0x40] sm:$0xff]
    %v283 = vld [vmem:[#allocation4 + $0x48] sm:$0xff]
    %v284 = vld [vmem:[#allocation4 + $0x50] sm:$0xff]
    %v285 = vld [vmem:[#allocation4 + $0x58] sm:$0xff]
    %v286 = vld [vmem:[#allocation4 + $0x60] sm:$0xff]
    %v287 = vld [vmem:[#allocation4 + $0x68] sm:$0xff]
    %v288 = vld [vmem:[#allocation4 + $0x70] sm:$0xff]
    %v289 = vld [vmem:[#allocation4 + $0x78] sm:$0xff]
    %v290 = vld [vmem:[%s6] sm:$0x1]
    %v292 = vlaneseq
    %v293 = vshrl.u32 %v292, 7
    %v294 = vsub.s32 0, %v293
    %v295 = vrot.slane %v290, %v294
    %297 = vmatprep.subr.mxu0 0.0
    %298 = vmatpush1.msra.mxu0 %v274
    %299 = vmatprep.subr.mxu0 0.0
    %300 = vmatpush1.msra.mxu0 %v275
    %301 = vmatprep.subr.mxu0 0.0
    %302 = vmatpush1.msra.mxu0 %v276
    %303 = vmatprep.subr.mxu0 0.0
    %304 = vmatpush1.msra.mxu0 %v277
    %305 = vmatprep.subr.mxu0 0.0
    %306 = vmatpush1.msra.mxu0 %v278
    %307 = vmatprep.subr.mxu0 0.0
    %308 = vmatpush1.msra.mxu0 %v279
    %309 = vmatprep.subr.mxu0 0.0
    %310 = vmatpush1.msra.mxu0 %v280
    %311 = vmatprep.subr.mxu0 0.0
    %312 = vmatpush1.msra.mxu0 %v281
    %313 = vmatprep.subr.mxu0 0.0
    %314 = vmatpush1.msra.mxu0 %v282
    %315 = vmatprep.subr.mxu0 0.0
    %316 = vmatpush1.msra.mxu0 %v283
    %317 = vmatprep.subr.mxu0 0.0
    %318 = vmatpush1.msra.mxu0 %v284
    %319 = vmatprep.subr.mxu0 0.0
    %320 = vmatpush1.msra.mxu0 %v285
    %321 = vmatprep.subr.mxu0 0.0
    %322 = vmatpush1.msra.mxu0 %v286
    %323 = vmatprep.subr.mxu0 0.0
    %324 = vmatpush1.msra.mxu0 %v287
    %325 = vmatprep.subr.mxu0 0.0
    %326 = vmatpush1.msra.mxu0 %v288
    %327 = vmatprep.subr.mxu0 0.0
    %328 = vmatpush1.msra.mxu0 %v289
    %329 = vmatprep.subr.mxu0 0.0
    %330 = vmatpush1.msra.mxu0 0.0
    %331 = vmatprep.subr.mxu0 0.0
    %332 = vmatpush1.msra.mxu0 0.0
    %333 = vmatprep.subr.mxu0 0.0
    %334 = vmatpush1.msra.mxu0 0.0
    %335 = vmatprep.subr.mxu0 0.0
    %336 = vmatpush1.msra.mxu0 0.0
    %337 = vmatprep.subr.mxu0 0.0
    %338 = vmatpush1.msra.mxu0 0.0
    %339 = vmatprep.subr.mxu0 0.0
    %340 = vmatpush1.msra.mxu0 0.0
    %341 = vmatprep.subr.mxu0 0.0
    %342 = vmatpush1.msra.mxu0 0.0
    %343 = vmatprep.subr.mxu0 0.0
    %344 = vmatpush1.msra.mxu0 0.0
    %345 = vmatprep.subr.mxu0 0.0
    %346 = vmatpush1.msra.mxu0 0.0
    %347 = vmatprep.subr.mxu0 0.0
    %348 = vmatpush1.msra.mxu0 0.0
    %349 = vmatprep.subr.mxu0 0.0
    %350 = vmatpush1.msra.mxu0 0.0
    %351 = vmatprep.subr.mxu0 0.0
    %352 = vmatpush1.msra.mxu0 0.0
    %353 = vmatprep.subr.mxu0 0.0
    %354 = vmatpush1.msra.mxu0 0.0
    %355 = vmatprep.subr.mxu0 0.0
    %356 = vmatpush1.msra.mxu0 0.0
    %357 = vmatprep.subr.mxu0 0.0
    %358 = vmatpush1.msra.mxu0 0.0
    %359 = vmatprep.subr.mxu0 0.0
    %360 = vmatpush1.msra.mxu0 0.0
    %361 = vmatprep.mubr.f32.mxu0 0.0
    %362 = vmatmul.mubr.f32.gmra.mrb[0].mxu0 %v273
    %v363 = vpop.f32.mrb[0].mxu0
    %v364 = vadd.f32 %v295, %v363
    %v365 = vpop.f32.mrb[0].mxu0
    %366 = vdwg.mxu0
    %v367 = vmax.f32 %v364, 0.0
    %v368 = vld [vmem:[%s7] sm:$0xff]
    %v369 = vld [vmem:[%s7 + $0x8] sm:$0xff]
    %v370 = vld [vmem:[%s7 + $0x10] sm:$0xff]
    %v371 = vld [vmem:[%s7 + $0x18] sm:$0xff]
    %v372 = vld [vmem:[%s7 + $0x20] sm:$0xff]
    %v373 = vld [vmem:[%s7 + $0x28] sm:$0xff]
    %v374 = vld [vmem:[%s7 + $0x30] sm:$0xff]
    %v375 = vld [vmem:[%s7 + $0x38] sm:$0xff]
    %v376 = vld [vmem:[%s7 + $0x40] sm:$0xff]
    %v377 = vld [vmem:[%s7 + $0x48] sm:$0xff]
    %v378 = vld [vmem:[%s7 + $0x50] sm:$0xff]
    %v379 = vld [vmem:[%s7 + $0x58] sm:$0xff]
    %v380 = vld [vmem:[%s7 + $0x60] sm:$0xff]
    %v381 = vld [vmem:[%s7 + $0x68] sm:$0xff]
    %v382 = vld [vmem:[%s7 + $0x70] sm:$0xff]
    %v383 = vld [vmem:[%s7 + $0x78] sm:$0xff]
    %v384 = vld [vmem:[%s8] sm:$0x1]
    %v386 = vlaneseq
    %v387 = vshrl.u32 %v386, 7
    %v388 = vsub.s32 0, %v387
    %v389 = vrot.slane %v384, %v388
    %391 = vmatprep.subr.mxu0 0.0
    %392 = vmatpush1.msra.mxu0 %v368
    %393 = vmatprep.subr.mxu0 0.0
    %394 = vmatpush1.msra.mxu0 %v369
    %395 = vmatprep.subr.mxu0 0.0
    %396 = vmatpush1.msra.mxu0 %v370
    %397 = vmatprep.subr.mxu0 0.0
    %398 = vmatpush1.msra.mxu0 %v371
    %399 = vmatprep.subr.mxu0 0.0
    %400 = vmatpush1.msra.mxu0 %v372
    %401 = vmatprep.subr.mxu0 0.0
    %402 = vmatpush1.msra.mxu0 %v373
    %403 = vmatprep.subr.mxu0 0.0
    %404 = vmatpush1.msra.mxu0 %v374
    %405 = vmatprep.subr.mxu0 0.0
    %406 = vmatpush1.msra.mxu0 %v375
    %407 = vmatprep.subr.mxu0 0.0
    %408 = vmatpush1.msra.mxu0 %v376
    %409 = vmatprep.subr.mxu0 0.0
    %410 = vmatpush1.msra.mxu0 %v377
    %411 = vmatprep.subr.mxu0 0.0
    %412 = vmatpush1.msra.mxu0 %v378
    %413 = vmatprep.subr.mxu0 0.0
    %414 = vmatpush1.msra.mxu0 %v379
    %415 = vmatprep.subr.mxu0 0.0
    %416 = vmatpush1.msra.mxu0 %v380
    %417 = vmatprep.subr.mxu0 0.0
    %418 = vmatpush1.msra.mxu0 %v381
    %419 = vmatprep.subr.mxu0 0.0
    %420 = vmatpush1.msra.mxu0 %v382
    %421 = vmatprep.subr.mxu0 0.0
    %422 = vmatpush1.msra.mxu0 %v383
    %423 = vmatprep.subr.mxu0 0.0
    %424 = vmatpush1.msra.mxu0 0.0
    %425 = vmatprep.subr.mxu0 0.0
    %426 = vmatpush1.msra.mxu0 0.0
    %427 = vmatprep.subr.mxu0 0.0
    %428 = vmatpush1.msra.mxu0 0.0
    %429 = vmatprep.subr.mxu0 0.0
    %430 = vmatpush1.msra.mxu0 0.0
    %431 = vmatprep.subr.mxu0 0.0
    %432 = vmatpush1.msra.mxu0 0.0
    %433 = vmatprep.subr.mxu0 0.0
    %434 = vmatpush1.msra.mxu0 0.0
    %435 = vmatprep.subr.mxu0 0.0
    %436 = vmatpush1.msra.mxu0 0.0
    %437 = vmatprep.subr.mxu0 0.0
    %438 = vmatpush1.msra.mxu0 0.0
    %439 = vmatprep.subr.mxu0 0.0
    %440 = vmatpush1.msra.mxu0 0.0
    %441 = vmatprep.subr.mxu0 0.0
    %442 = vmatpush1.msra.mxu0 0.0
    %443 = vmatprep.subr.mxu0 0.0
    %444 = vmatpush1.msra.mxu0 0.0
    %445 = vmatprep.subr.mxu0 0.0
    %446 = vmatpush1.msra.mxu0 0.0
    %447 = vmatprep.subr.mxu0 0.0
    %448 = vmatpush1.msra.mxu0 0.0
    %449 = vmatprep.subr.mxu0 0.0
    %450 = vmatpush1.msra.mxu0 0.0
    %451 = vmatprep.subr.mxu0 0.0
    %452 = vmatpush1.msra.mxu0 0.0
    %453 = vmatprep.subr.mxu0 0.0
    %454 = vmatpush1.msra.mxu0 0.0
    %455 = vmatprep.mubr.f32.mxu0 0.0
    %456 = vmatmul.mubr.f32.gmra.mrb[0].mxu0 %v367
    %v457 = vpop.f32.mrb[0].mxu0
    %v458 = vadd.f32 %v389, %v457
    %v459 = vpop.f32.mrb[0].mxu0
    %460 = vdwg.mxu0
    %v461 = vmax.f32 %v458, 0.0
    %v462 = vld [vmem:[%s9] sm:$0xff]
    %v463 = vld [vmem:[%s9 + $0x8] sm:$0xff]
    %v464 = vld [vmem:[%s9 + $0x10] sm:$0xff]
    %v465 = vld [vmem:[%s9 + $0x18] sm:$0xff]
    %v466 = vld [vmem:[%s10] sm:$0x1]
    %v468 = vlaneseq
    %v469 = vshrl.u32 %v468, 7
    %v470 = vsub.s32 0, %v469
    %v471 = vrot.slane %v466, %v470
    %vm473 = vcmask 261120
    %v475 = vsel %vm473, %v461, 0
    %477 = vmatprep.subr.mxu0 0.0
    %478 = vmatpush1.msra.mxu0 %v462
    %479 = vmatprep.subr.mxu0 0.0
    %480 = vmatpush1.msra.mxu0 %v463
    %481 = vmatprep.subr.mxu0 0.0
    %482 = vmatpush1.msra.mxu0 %v464
    %483 = vmatprep.subr.mxu0 0.0
    %484 = vmatpush1.msra.mxu0 %v465
    %485 = vmatprep.subr.mxu0 0.0
    %486 = vmatpush1.msra.mxu0 0.0
    %487 = vmatprep.subr.mxu0 0.0
    %488 = vmatpush1.msra.mxu0 0.0
    %489 = vmatprep.subr.mxu0 0.0
    %490 = vmatpush1.msra.mxu0 0.0
    %491 = vmatprep.subr.mxu0 0.0
    %492 = vmatpush1.msra.mxu0 0.0
    %493 = vmatprep.subr.mxu0 0.0
    %494 = vmatpush1.msra.mxu0 0.0
    %495 = vmatprep.subr.mxu0 0.0
    %496 = vmatpush1.msra.mxu0 0.0
    %497 = vmatprep.subr.mxu0 0.0
    %498 = vmatpush1.msra.mxu0 0.0
    %499 = vmatprep.subr.mxu0 0.0
    %500 = vmatpush1.msra.mxu0 0.0
    %501 = vmatprep.subr.mxu0 0.0
    %502 = vmatpush1.msra.mxu0 0.0
    %503 = vmatprep.subr.mxu0 0.0
    %504 = vmatpush1.msra.mxu0 0.0
    %505 = vmatprep.subr.mxu0 0.0
    %506 = vmatpush1.msra.mxu0 0.0
    %507 = vmatprep.subr.mxu0 0.0
    %508 = vmatpush1.msra.mxu0 0.0
    %509 = vmatprep.subr.mxu0 0.0
    %510 = vmatpush1.msra.mxu0 0.0
    %511 = vmatprep.subr.mxu0 0.0
    %512 = vmatpush1.msra.mxu0 0.0
    %513 = vmatprep.subr.mxu0 0.0
    %514 = vmatpush1.msra.mxu0 0.0
    %515 = vmatprep.subr.mxu0 0.0
    %516 = vmatpush1.msra.mxu0 0.0
    %517 = vmatprep.subr.mxu0 0.0
    %518 = vmatpush1.msra.mxu0 0.0
    %519 = vmatprep.subr.mxu0 0.0
    %520 = vmatpush1.msra.mxu0 0.0
    %521 = vmatprep.subr.mxu0 0.0
    %522 = vmatpush1.msra.mxu0 0.0
    %523 = vmatprep.subr.mxu0 0.0
    %524 = vmatpush1.msra.mxu0 0.0
    %525 = vmatprep.subr.mxu0 0.0
    %526 = vmatpush1.msra.mxu0 0.0
    %527 = vmatprep.subr.mxu0 0.0
    %528 = vmatpush1.msra.mxu0 0.0
    %529 = vmatprep.subr.mxu0 0.0
    %530 = vmatpush1.msra.mxu0 0.0
    %531 = vmatprep.subr.mxu0 0.0
    %532 = vmatpush1.msra.mxu0 0.0
    %533 = vmatprep.subr.mxu0 0.0
    %534 = vmatpush1.msra.mxu0 0.0
    %535 = vmatprep.subr.mxu0 0.0
    %536 = vmatpush1.msra.mxu0 0.0
    %537 = vmatprep.subr.mxu0 0.0
    %538 = vmatpush1.msra.mxu0 0.0
    %539 = vmatprep.subr.mxu0 0.0
    %540 = vmatpush1.msra.mxu0 0.0
    %541 = vmatprep.mubr.f32.mxu0 0.0
    %542 = vmatmul.mubr.f32.gmra.mrb[0].mxu0 %v475
    %v543 = vpop.f32.mrb[0].mxu0
    %v544 = vadd.f32 %v471, %v543
    %v545 = vpop.f32.mrb[0].mxu0
    %546 = vdwg.mxu0
    %v547 = vmax.f32 %v544, 0.0
    %v548 = vld [vmem:[%s11] sm:$0xff]
    %v549 = vld [vmem:[%s11 + $0x8] sm:$0xff]
    %v550 = vld [vmem:[#allocation2] sm:$0x1]
    %v552 = vlaneseq
    %v553 = vshrl.u32 %v552, 7
    %v554 = vsub.s32 0, %v553
    %v555 = vrot.slane %v550, %v554
    %v558 = vsel %vm87, %v547, 0
    %560 = vmatprep.subr.mxu0 0.0
    %561 = vmatpush1.msra.mxu0 %v548
    %562 = vmatprep.subr.mxu0 0.0
    %563 = vmatpush1.msra.mxu0 %v549
    %564 = vmatprep.subr.mxu0 0.0
    %565 = vmatpush1.msra.mxu0 0.0
    %566 = vmatprep.subr.mxu0 0.0
    %567 = vmatpush1.msra.mxu0 0.0
    %568 = vmatprep.subr.mxu0 0.0
    %569 = vmatpush1.msra.mxu0 0.0
    %570 = vmatprep.subr.mxu0 0.0
    %571 = vmatpush1.msra.mxu0 0.0
    %572 = vmatprep.subr.mxu0 0.0
    %573 = vmatpush1.msra.mxu0 0.0
    %574 = vmatprep.subr.mxu0 0.0
    %575 = vmatpush1.msra.mxu0 0.0
    %576 = vmatprep.subr.mxu0 0.0
    %577 = vmatpush1.msra.mxu0 0.0
    %578 = vmatprep.subr.mxu0 0.0
    %579 = vmatpush1.msra.mxu0 0.0
    %580 = vmatprep.subr.mxu0 0.0
    %581 = vmatpush1.msra.mxu0 0.0
    %582 = vmatprep.subr.mxu0 0.0
    %583 = vmatpush1.msra.mxu0 0.0
    %584 = vmatprep.subr.mxu0 0.0
    %585 = vmatpush1.msra.mxu0 0.0
    %586 = vmatprep.subr.mxu0 0.0
    %587 = vmatpush1.msra.mxu0 0.0
    %588 = vmatprep.subr.mxu0 0.0
    %589 = vmatpush1.msra.mxu0 0.0
    %590 = vmatprep.subr.mxu0 0.0
    %591 = vmatpush1.msra.mxu0 0.0
    %592 = vmatprep.subr.mxu0 0.0
    %593 = vmatpush1.msra.mxu0 0.0
    %594 = vmatprep.subr.mxu0 0.0
    %595 = vmatpush1.msra.mxu0 0.0
    %596 = vmatprep.subr.mxu0 0.0
    %597 = vmatpush1.msra.mxu0 0.0
    %598 = vmatprep.subr.mxu0 0.0
    %599 = vmatpush1.msra.mxu0 0.0
    %600 = vmatprep.subr.mxu0 0.0
    %601 = vmatpush1.msra.mxu0 0.0
    %602 = vmatprep.subr.mxu0 0.0
    %603 = vmatpush1.msra.mxu0 0.0
    %604 = vmatprep.subr.mxu0 0.0
    %605 = vmatpush1.msra.mxu0 0.0
    %606 = vmatprep.subr.mxu0 0.0
    %607 = vmatpush1.msra.mxu0 0.0
    %608 = vmatprep.subr.mxu0 0.0
    %609 = vmatpush1.msra.mxu0 0.0
    %610 = vmatprep.subr.mxu0 0.0
    %611 = vmatpush1.msra.mxu0 0.0
    %612 = vmatprep.subr.mxu0 0.0
    %613 = vmatpush1.msra.mxu0 0.0
    %614 = vmatprep.subr.mxu0 0.0
    %615 = vmatpush1.msra.mxu0 0.0
    %616 = vmatprep.subr.mxu0 0.0
    %617 = vmatpush1.msra.mxu0 0.0
    %618 = vmatprep.subr.mxu0 0.0
    %619 = vmatpush1.msra.mxu0 0.0
    %620 = vmatprep.subr.mxu0 0.0
    %621 = vmatpush1.msra.mxu0 0.0
    %622 = vmatprep.subr.mxu0 0.0
    %623 = vmatpush1.msra.mxu0 0.0
    %624 = vmatprep.mubr.f32.mxu0 0.0
    %625 = vmatmul.mubr.f32.gmra.mrb[0].mxu0 %v558
    %v626 = vpop.f32.mrb[0].mxu0
    %v627 = vadd.f32 %v555, %v626
    %v628 = vpop.f32.mrb[0].mxu0
    %629 = vdwg.mxu0
    %v630 = vtanh.pop %v627
    %vm631 = vcmask 7168
    %632 = vst.msk [vmem:[%s15] sm:$0xff] %vm631, %v630
    %v633 = vld [vmem:[%s13] sm:$0xff]
    %v634 = vld [vmem:[%s13 + $0x8] sm:$0xff]
    %v635 = vld [vmem:[%s13 + $0x10] sm:$0xff]
    %v636 = vld [vmem:[%s13 + $0x18] sm:$0xff]
    %v637 = vld [vmem:[%s13 + $0x20] sm:$0xff]
    %v638 = vld [vmem:[%s13 + $0x28] sm:$0xff]
    %v639 = vld [vmem:[%s13 + $0x30] sm:$0xff]
    %v640 = vld [vmem:[%s13 + $0x38] sm:$0xff]
    %v641 = vld [vmem:[%s13 + $0x40] sm:$0xff]
    %v642 = vld [vmem:[%s13 + $0x48] sm:$0xff]
    %v643 = vld [vmem:[%s13 + $0x50] sm:$0xff]
    %v644 = vld [vmem:[%s13 + $0x58] sm:$0xff]
    %v645 = vld [vmem:[%s13 + $0x60] sm:$0xff]
    %v646 = vld [vmem:[%s13 + $0x68] sm:$0xff]
    %v647 = vld [vmem:[%s13 + $0x70] sm:$0xff]
    %v648 = vld [vmem:[%s13 + $0x78] sm:$0xff]
    %v649 = vld [vmem:[#allocation3] sm:$0x1]
    %v651 = vlaneseq
    %v652 = vshrl.u32 %v651, 7
    %v653 = vsub.s32 0, %v652
    %v654 = vrot.slane %v649, %v653
    %656 = vmatprep.subr.mxu0 0.0
    %657 = vmatpush1.msra.mxu0 %v633
    %658 = vmatprep.subr.mxu0 0.0
    %659 = vmatpush1.msra.mxu0 %v634
    %660 = vmatprep.subr.mxu0 0.0
    %661 = vmatpush1.msra.mxu0 %v635
    %662 = vmatprep.subr.mxu0 0.0
    %663 = vmatpush1.msra.mxu0 %v636
    %664 = vmatprep.subr.mxu0 0.0
    %665 = vmatpush1.msra.mxu0 %v637
    %666 = vmatprep.subr.mxu0 0.0
    %667 = vmatpush1.msra.mxu0 %v638
    %668 = vmatprep.subr.mxu0 0.0
    %669 = vmatpush1.msra.mxu0 %v639
    %670 = vmatprep.subr.mxu0 0.0
    %671 = vmatpush1.msra.mxu0 %v640
    %672 = vmatprep.subr.mxu0 0.0
    %673 = vmatpush1.msra.mxu0 %v641
    %674 = vmatprep.subr.mxu0 0.0
    %675 = vmatpush1.msra.mxu0 %v642
    %676 = vmatprep.subr.mxu0 0.0
    %677 = vmatpush1.msra.mxu0 %v643
    %678 = vmatprep.subr.mxu0 0.0
    %679 = vmatpush1.msra.mxu0 %v644
    %680 = vmatprep.subr.mxu0 0.0
    %681 = vmatpush1.msra.mxu0 %v645
    %682 = vmatprep.subr.mxu0 0.0
    %683 = vmatpush1.msra.mxu0 %v646
    %684 = vmatprep.subr.mxu0 0.0
    %685 = vmatpush1.msra.mxu0 %v647
    %686 = vmatprep.subr.mxu0 0.0
    %687 = vmatpush1.msra.mxu0 %v648
    %688 = vmatprep.subr.mxu0 0.0
    %689 = vmatpush1.msra.mxu0 0.0
    %690 = vmatprep.subr.mxu0 0.0
    %691 = vmatpush1.msra.mxu0 0.0
    %692 = vmatprep.subr.mxu0 0.0
    %693 = vmatpush1.msra.mxu0 0.0
    %694 = vmatprep.subr.mxu0 0.0
    %695 = vmatpush1.msra.mxu0 0.0
    %696 = vmatprep.subr.mxu0 0.0
    %697 = vmatpush1.msra.mxu0 0.0
    %698 = vmatprep.subr.mxu0 0.0
    %699 = vmatpush1.msra.mxu0 0.0
    %700 = vmatprep.subr.mxu0 0.0
    %701 = vmatpush1.msra.mxu0 0.0
    %702 = vmatprep.subr.mxu0 0.0
    %703 = vmatpush1.msra.mxu0 0.0
    %704 = vmatprep.subr.mxu0 0.0
    %705 = vmatpush1.msra.mxu0 0.0
    %706 = vmatprep.subr.mxu0 0.0
    %707 = vmatpush1.msra.mxu0 0.0
    %708 = vmatprep.subr.mxu0 0.0
    %709 = vmatpush1.msra.mxu0 0.0
    %710 = vmatprep.subr.mxu0 0.0
    %711 = vmatpush1.msra.mxu0 0.0
    %712 = vmatprep.subr.mxu0 0.0
    %713 = vmatpush1.msra.mxu0 0.0
    %714 = vmatprep.subr.mxu0 0.0
    %715 = vmatpush1.msra.mxu0 0.0
    %716 = vmatprep.subr.mxu0 0.0
    %717 = vmatpush1.msra.mxu0 0.0
    %718 = vmatprep.subr.mxu0 0.0
    %719 = vmatpush1.msra.mxu0 0.0
    %720 = vmatprep.mubr.f32.mxu0 0.0
    %721 = vmatmul.mubr.f32.gmra.mrb[0].mxu0 %v367
    %v722 = vpop.f32.mrb[0].mxu0
    %v723 = vadd.f32 %v654, %v722
    %v724 = vpop.f32.mrb[0].mxu0
    %725 = vdwg.mxu0
    %726 = vst.msk [vmem:[%s16] sm:$0xff] %vm631, %v723
    // Predicated region
    $region66: #{tpu_custom_call.1} parent=1 // pred_check
      _
    $region67: #{tpu_custom_call.1} parent=1 // pred_check_branch
      %728 = sbr.rel (0) target = $region69
    $region68: #{tpu_custom_call.1} parent=1 // pred_region
      _
    $region69: #{tpu_custom_call.1} parent=1 // pred_fallthru
      _
    // Predicated region
    $region70: #{tpu_custom_call.1} parent=1 // pred_check
      _
    $region71: #{tpu_custom_call.1} parent=1 // pred_check_branch
      %730 = sbr.rel (0) target = $region73
    $region72: #{tpu_custom_call.1} parent=1 // pred_region
      _
    $region73: #{tpu_custom_call.1} parent=1 // pred_fallthru
      _
    // Predicated region
    $region74: #{tpu_custom_call.1} parent=1 // pred_check
      _
    $region75: #{tpu_custom_call.1} parent=1 // pred_check_branch
      %732 = sbr.rel (0) target = $region77
    $region76: #{tpu_custom_call.1} parent=1 // pred_region
      _
    $region77: #{tpu_custom_call.1} parent=1 // pred_fallthru
      _
    // Predicated region
    $region78: #{tpu_custom_call.1} parent=1 // pred_check
      _
    $region79: #{tpu_custom_call.1} parent=1 // pred_check_branch
      %734 = sbr.rel (0) target = $region81
    $region80: #{tpu_custom_call.1} parent=1 // pred_region
      _
    $region81: #{tpu_custom_call.1} parent=1 // pred_fallthru
      _
    %735 = vsyncpa [#allocation5], 1

</llo_original>
